<compile_context>
chip_gen: v5e
topology: v5e:2x2
jax: 0.10.0
libtpu: 0.0.40
codegen_flags: <defaults>
</compile_context>

<pallas_src>
import math

import jax
import jax.numpy as jnp
from jax.experimental import pallas as pl
from jax.experimental.pallas import tpu as pltpu

# Small, TPU-friendly synthetic sizes.
N = 16      # number of nodes
K = 8       # number of eigenvectors
H = 8       # phi hidden / output width (per eigenvector)
RH = 32     # rho hidden width
OUT = 16    # rho output width
EPS = 0.0   # GIN epsilon (deterministic init)

TILE_N = 8  # node row-tile (multiple of 8); grid axis is 'parallel'


def _r8(x):
    return ((x + 7) // 8) * 8


# Packed parameter slab layout: every section starts on an 8-row boundary.
KH = K * H
OFF_E = 0                      # [K,  KH ]  I_K (x) w1   (phi layer-1, lane-dense)
OFF_BT = OFF_E + _r8(K)        # [1,  KH ]  tile(b1, K)
OFF_WF = OFF_BT + 8            # [KH, RH ]  blockdiag(w2) @ rw1_flat (phi-2 o rho-1)
OFF_RB1 = OFF_WF + _r8(KH)     # [1,  RH ]  rb1 + 2 * b2 @ sum_k rw1[k]
OFF_RW2 = OFF_RB1 + 8          # [RH, OUT]
OFF_RB2 = OFF_RW2 + _r8(RH)    # [1,  OUT]
SLAB_ROWS = OFF_RB2 + 8        # 128
SLAB_COLS = max(KH, RH, OUT)   # 64


def signinv_kernel(a_ref, v_ref, p_ref, o_ref):
    """One node row-tile: aggregation, sign-invariant phi layer-1, fused phi-2/rho."""
    i = pl.program_id(0)
    row0 = pl.multiple_of(i * TILE_N, TILE_N)

    A_rows = a_ref[...]                             # [TILE_N, N]
    V_full = v_ref[...]                             # [N, K]
    V_rows = v_ref[pl.ds(row0, TILE_N), :]          # [TILE_N, K]

    # Static, 8-row-aligned slices of the packed parameter slab.
    E = p_ref[OFF_E:OFF_E + K, :KH]                 # [K, KH]
    bt = p_ref[OFF_BT:OFF_BT + 1, :KH]              # [1, KH]
    Wf = p_ref[OFF_WF:OFF_WF + KH, :RH]             # [KH, RH]
    rb1f = p_ref[OFF_RB1:OFF_RB1 + 1, :RH]          # [1, RH]
    rw2 = p_ref[OFF_RW2:OFF_RW2 + RH, :OUT]         # [RH, OUT]
    rb2 = p_ref[OFF_RB2:OFF_RB2 + 1, :OUT]          # [1, OUT]

    # GIN aggregation for all eigenvector columns at once (MXU matmul #1).
    preV = (1.0 + EPS) * V_rows + jnp.dot(
        A_rows, V_full, preferred_element_type=jnp.float32)        # [TILE_N, K]

    # phi layer 1, lane-dense: Z[:, k*H+h] = preV[:, k] * w1[h]  (MXU matmul #2).
    Z = jnp.dot(preV, E, preferred_element_type=jnp.float32)       # [TILE_N, KH]
    # Sign-invariant combine (aggregation is linear, so pre(-V) == -pre(V)).
    comb = jnp.maximum(Z + bt, 0.0) + jnp.maximum(-Z + bt, 0.0)    # [TILE_N, KH]

    # phi layer 2 + rho layer 1, folded into one matmul (MXU matmul #3).
    r1 = jnp.maximum(
        jnp.dot(comb, Wf, preferred_element_type=jnp.float32) + rb1f, 0.0)  # [TILE_N, RH]

    # rho layer 2 (MXU matmul #4).
    out = jnp.dot(r1, rw2, preferred_element_type=jnp.float32) + rb2        # [TILE_N, OUT]
    o_ref[...] = out.astype(o_ref.dtype)


def _fuse_and_pack_params(params):
    """Host-side constant folding + packing into one VMEM slab."""
    w1, b1, w2, b2 = params["w1"], params["b1"], params["w2"], params["b2"]
    rw1, rb1, rw2, rb2 = params["rw1"], params["rb1"], params["rw2"], params["rb2"]

    E = jnp.kron(jnp.eye(K, dtype=jnp.float32), w1)              # [K, KH], I_K (x) w1
    bt = jnp.tile(b1, (1, K))                                    # [1, KH]
    Wf = jnp.einsum("hg,kgr->khr", w2, rw1).reshape(KH, RH)      # blockdiag(w2) @ rw1_flat
    rb1f = rb1 + 2.0 * (b2 @ rw1.sum(axis=0))                    # [1, RH]

    slab = jnp.zeros((SLAB_ROWS, SLAB_COLS), jnp.float32)
    slab = slab.at[OFF_E:OFF_E + K, :KH].set(E)
    slab = slab.at[OFF_BT:OFF_BT + 1, :KH].set(bt)
    slab = slab.at[OFF_WF:OFF_WF + KH, :RH].set(Wf)
    slab = slab.at[OFF_RB1:OFF_RB1 + 1, :RH].set(rb1f)
    slab = slab.at[OFF_RW2:OFF_RW2 + RH, :OUT].set(rw2)
    slab = slab.at[OFF_RB2:OFF_RB2 + 1, :OUT].set(rb2)
    return slab


def sign_inv_pe(Lambda, V, edge_index, batch, params):
    """JAX wrapper: builds dense adjacency (glue), fuses params, calls the kernel.

    Lambda and batch mirror the PyTorch signature; like the reference forward,
    they do not participate in the computation.
    """
    del Lambda, batch
    n = V.shape[0]
    src, dst = edge_index[0], edge_index[1]
    # MessagePassing sum-aggregation: message from src j lands at dst i.
    A = jnp.zeros((n, n), jnp.float32).at[dst, src].add(1.0)
    slab = _fuse_and_pack_params(params)

    grid = (pl.cdiv(n, TILE_N),)
    return pl.pallas_call(
        signinv_kernel,
        out_shape=jax.ShapeDtypeStruct((n, OUT), jnp.float32),
        grid_spec=pltpu.PrefetchScalarGridSpec(
            num_scalar_prefetch=0,
            grid=grid,
            in_specs=[
                pl.BlockSpec((TILE_N, n), lambda i: (i, 0)),             # A row-tile
                pl.BlockSpec((n, K), lambda i: (0, 0)),                  # V (resident)
                pl.BlockSpec((SLAB_ROWS, SLAB_COLS), lambda i: (0, 0)),  # param slab
            ],
            out_specs=pl.BlockSpec((TILE_N, OUT), lambda i: (i, 0)),
        ),
        compiler_params=pltpu.CompilerParams(
            dimension_semantics=("parallel",)),
    )(A, V.astype(jnp.float32), slab)


def ref_forward(V, edge_index, params):
    """Pure-JAX reference matching the PyTorch forward semantics exactly."""
    n = V.shape[0]
    src, dst = edge_index[0], edge_index[1]
    A = jnp.zeros((n, n), jnp.float32).at[dst, src].add(1.0)

    def phi(x):                          # x: [N, K, 1]
        agg = jnp.einsum("nm,mkc->nkc", A, x)
        pre = (1.0 + EPS) * x + agg
        h1 = jnp.maximum(jnp.einsum("nkc,ch->nkh", pre, params["w1"])
                         + params["b1"][0], 0.0)
        return jnp.einsum("nkh,hg->nkg", h1, params["w2"]) + params["b2"][0]

    x = V[..., None]
    h = phi(x) + phi(-x)                 # [N, K, H]
    hf = h.reshape(h.shape[0], -1)       # [N, K*H]
    rw1_flat = params["rw1"].reshape(K * H, RH)
    r = jnp.maximum(hf @ rw1_flat + params["rb1"][0], 0.0)
    return r @ params["rw2"] + params["rb2"][0]


def init_params(key):
    ks = jax.random.split(key, 8)
    return {
        "w1": jax.random.normal(ks[0], (1, H), jnp.float32) * 0.5,
        "b1": jax.random.normal(ks[1], (1, H), jnp.float32) * 0.1,
        "w2": jax.random.normal(ks[2], (H, H), jnp.float32) / math.sqrt(H),
        "b2": jax.random.normal(ks[3], (1, H), jnp.float32) * 0.1,
        # rho layer-1 weight stored as [K, H, RH] == reshape of [K*H, RH]
        "rw1": jax.random.normal(ks[4], (K, H, RH), jnp.float32) / math.sqrt(K * H),
        "rb1": jax.random.normal(ks[5], (1, RH), jnp.float32) * 0.1,
        "rw2": jax.random.normal(ks[6], (RH, OUT), jnp.float32) / math.sqrt(RH),
        "rb2": jax.random.normal(ks[7], (1, OUT), jnp.float32) * 0.1,
    }


if __name__ == "__main__":
    key = jax.random.PRNGKey(0)
    k_param, k_v, k_lam = jax.random.split(key, 3)

    params = init_params(k_param)

    # Deterministic example inputs: a single ring graph with N nodes.
    V = jax.random.normal(k_v, (N, K), jnp.float32)          # eigenvectors
    Lambda = jax.random.uniform(k_lam, (K,), jnp.float32)    # eigenvalues (unused)
    idx = jnp.arange(N, dtype=jnp.int32)
    nxt = (idx + 1) % N
    edge_index = jnp.stack(
        [jnp.concatenate([idx, nxt]), jnp.concatenate([nxt, idx])], axis=0
    )                                                         # [2, 2N], undirected ring
    batch = jnp.zeros((N,), jnp.int32)                        # single graph (unused)

    out = sign_inv_pe(Lambda, V, edge_index, batch, params)
    out = jax.block_until_ready(out)

    ref = ref_forward(V, edge_index, params)
    assert out.shape == (N, OUT)
    assert jnp.allclose(out, ref, atol=1e-4, rtol=1e-4), (
        f"max abs err {jnp.max(jnp.abs(out - ref))}")

    print("KERNEL_OK")
</pallas_src>

<mosaic_0001>
module attributes {stable_mosaic.version = 11 : i64} {
  func.func @signinv_kernel(%arg0: i32, %arg1: memref<8x16xf32, #tpu.memory_space<vmem>>, %arg2: memref<16x8xf32, #tpu.memory_space<vmem>>, %arg3: memref<128x64xf32, #tpu.memory_space<vmem>>, %arg4: memref<8x16xf32, #tpu.memory_space<vmem>>) attributes {dimension_semantics = [#tpu.dimension_semantics<parallel>], iteration_bounds = array<i64: 2>, scalar_prefetch = 0 : i64, scratch_operands = 0 : i64, tpu.core_type = #tpu.core_type<tc>, window_params = [{transform_indices = @transform_0, window_bounds = array<i64: 8, 16>}, {pipeline_mode = #tpu.pipeline_mode<synchronous>, transform_indices = @transform_1, window_bounds = array<i64: 16, 8>}, {pipeline_mode = #tpu.pipeline_mode<synchronous>, transform_indices = @transform_2, window_bounds = array<i64: 128, 64>}, {transform_indices = @transform_3, window_bounds = array<i64: 8, 16>}]} {
    %c8_i32 = arith.constant 8 : i32
    %0 = arith.muli %arg0, %c8_i32 : i32
    %1 = tpu.assume_multiple %0, 8 : i32
    %c0 = arith.constant 0 : index
    %c0_0 = arith.constant 0 : index
    %2 = vector.load %arg1[%c0, %c0_0] : memref<8x16xf32, #tpu.memory_space<vmem>>, vector<8x16xf32>
    %c0_1 = arith.constant 0 : index
    %c0_2 = arith.constant 0 : index
    %3 = vector.load %arg2[%c0_1, %c0_2] : memref<16x8xf32, #tpu.memory_space<vmem>>, vector<16x8xf32>
    %4 = arith.index_cast %1 : i32 to index
    %c0_3 = arith.constant 0 : index
    %5 = vector.load %arg2[%4, %c0_3] : memref<16x8xf32, #tpu.memory_space<vmem>>, vector<8x8xf32>
    %c0_4 = arith.constant 0 : index
    %c0_5 = arith.constant 0 : index
    %6 = vector.load %arg3[%c0_4, %c0_5] : memref<128x64xf32, #tpu.memory_space<vmem>>, vector<8x64xf32>
    %c8 = arith.constant 8 : index
    %c0_6 = arith.constant 0 : index
    %7 = vector.load %arg3[%c8, %c0_6] : memref<128x64xf32, #tpu.memory_space<vmem>>, vector<1x64xf32>
    %c16 = arith.constant 16 : index
    %c0_7 = arith.constant 0 : index
    %8 = vector.load %arg3[%c16, %c0_7] : memref<128x64xf32, #tpu.memory_space<vmem>>, vector<64x32xf32>
    %c80 = arith.constant 80 : index
    %c0_8 = arith.constant 0 : index
    %9 = vector.load %arg3[%c80, %c0_8] : memref<128x64xf32, #tpu.memory_space<vmem>>, vector<1x32xf32>
    %c88 = arith.constant 88 : index
    %c0_9 = arith.constant 0 : index
    %10 = vector.load %arg3[%c88, %c0_9] : memref<128x64xf32, #tpu.memory_space<vmem>>, vector<32x16xf32>
    %c120 = arith.constant 120 : index
    %c0_10 = arith.constant 0 : index
    %11 = vector.load %arg3[%c120, %c0_10] : memref<128x64xf32, #tpu.memory_space<vmem>>, vector<1x16xf32>
    %cst = arith.constant 1.000000e+00 : f32
    %12 = vector.broadcast %cst : f32 to vector<8x8xf32>
    %13 = arith.mulf %12, %5 : vector<8x8xf32>
    %cst_11 = arith.constant dense<0.000000e+00> : vector<8x8xf32>
    %14 = tpu.matmul %2, %3, %cst_11 {dimension_numbers = #tpu.dot_dimension_numbers<[1], [0], [0], [1], [0, 0, 1, 1], [], []>} : vector<8x16xf32>, vector<16x8xf32>, vector<8x8xf32> -> vector<8x8xf32>
    %15 = arith.addf %13, %14 : vector<8x8xf32>
    %cst_12 = arith.constant dense<0.000000e+00> : vector<8x64xf32>
    %16 = tpu.matmul %15, %6, %cst_12 {dimension_numbers = #tpu.dot_dimension_numbers<[1], [0], [0], [1], [0, 0, 1, 1], [], []>} : vector<8x8xf32>, vector<8x64xf32>, vector<8x64xf32> -> vector<8x64xf32>
    %17 = vector.broadcast %7 : vector<1x64xf32> to vector<8x64xf32>
    %18 = arith.addf %16, %17 : vector<8x64xf32>
    %cst_13 = arith.constant 0.000000e+00 : f32
    %19 = vector.broadcast %cst_13 : f32 to vector<8x64xf32>
    %20 = arith.maximumf %18, %19 : vector<8x64xf32>
    %cst_14 = arith.constant 0.000000e+00 : f32
    %21 = vector.broadcast %cst_14 : f32 to vector<8x64xf32>
    %22 = arith.subf %21, %16 : vector<8x64xf32>
    %23 = vector.broadcast %7 : vector<1x64xf32> to vector<8x64xf32>
    %24 = arith.addf %22, %23 : vector<8x64xf32>
    %cst_15 = arith.constant 0.000000e+00 : f32
    %25 = vector.broadcast %cst_15 : f32 to vector<8x64xf32>
    %26 = arith.maximumf %24, %25 : vector<8x64xf32>
    %27 = arith.addf %20, %26 : vector<8x64xf32>
    %cst_16 = arith.constant dense<0.000000e+00> : vector<8x32xf32>
    %28 = tpu.matmul %27, %8, %cst_16 {dimension_numbers = #tpu.dot_dimension_numbers<[1], [0], [0], [1], [0, 0, 1, 1], [], []>} : vector<8x64xf32>, vector<64x32xf32>, vector<8x32xf32> -> vector<8x32xf32>
    %29 = vector.broadcast %9 : vector<1x32xf32> to vector<8x32xf32>
    %30 = arith.addf %28, %29 : vector<8x32xf32>
    %cst_17 = arith.constant 0.000000e+00 : f32
    %31 = vector.broadcast %cst_17 : f32 to vector<8x32xf32>
    %32 = arith.maximumf %30, %31 : vector<8x32xf32>
    %cst_18 = arith.constant dense<0.000000e+00> : vector<8x16xf32>
    %33 = tpu.matmul %32, %10, %cst_18 {dimension_numbers = #tpu.dot_dimension_numbers<[1], [0], [0], [1], [0, 0, 1, 1], [], []>} : vector<8x32xf32>, vector<32x16xf32>, vector<8x16xf32> -> vector<8x16xf32>
    %34 = vector.broadcast %11 : vector<1x16xf32> to vector<8x16xf32>
    %35 = arith.addf %33, %34 : vector<8x16xf32>
    %c0_19 = arith.constant 0 : index
    %c0_20 = arith.constant 0 : index
    %36 = vector.load %arg4[%c0_19, %c0_20] : memref<8x16xf32, #tpu.memory_space<vmem>>, vector<8x16xf32>
    tpu.vector_store %arg4[%c0_19, %c0_20], %35 {strides = array<i32>} : memref<8x16xf32, #tpu.memory_space<vmem>>, vector<8x16xf32>,
    return
  }
  func.func @transform_0(%arg0: i32) -> (i32, i32) {
    %c0_i32 = arith.constant 0 : i32
    %c0_i32_0 = arith.constant 0 : i32
    return %arg0, %c0_i32 : i32, i32
  }
  func.func @transform_1(%arg0: i32) -> (i32, i32) {
    %c0_i32 = arith.constant 0 : i32
    %c0_i32_0 = arith.constant 0 : i32
    %c0_i32_1 = arith.constant 0 : i32
    return %c0_i32, %c0_i32_0 : i32, i32
  }
  func.func @transform_2(%arg0: i32) -> (i32, i32) {
    %c0_i32 = arith.constant 0 : i32
    %c0_i32_0 = arith.constant 0 : i32
    %c0_i32_1 = arith.constant 0 : i32
    return %c0_i32, %c0_i32_0 : i32, i32
  }
  func.func @transform_3(%arg0: i32) -> (i32, i32) {
    %c0_i32 = arith.constant 0 : i32
    %c0_i32_0 = arith.constant 0 : i32
    return %arg0, %c0_i32 : i32, i32
  }
}

</mosaic_0001>

<llo_original>
// kernel: tpu_custom_call.1
$region0: #{tpu_custom_call.1}
  #allocation0 [shape = 'u32[]', space=smem, size = 0x4, offset = 0x4, fixed_abs, tag = 'smem constant byte address 0x4 - core index']
  #allocation1 [shape = 'u32[72,128]{1,0:T(1,128)}', space=vmem, size = 0x9000, scoped, tag = 'internal scratch']
  %s0 = inlined_call_operand.vmem [shape: f32[16,16], index: 0, kind: input, shape index: {}]
  %s1 = inlined_call_operand.vmem [shape: f32[16,8], index: 1, kind: input, shape index: {}]
  %s2 = inlined_call_operand.vmem [shape: f32[128,64], index: 2, kind: input, shape index: {}]
  %s3 = inlined_call_operand.hbm [shape: f32[16,16], index: 3, kind: output, shape index: {}]
  %s4 = sld [smem:[#allocation0]]
  $region45: #{tpu_custom_call.1} parent=0
    _
  %s6 = ssub.s32 1, %s4
  %s7 = scalar_select 0, %s6, %s4
  $region1: #{tpu_custom_call.1} parent=0
    #allocation2 [shape = 'u8[8192]{0}', space=vmem, size = 0x2000, scoped, tag = 'output window, operand 0']
    #allocation3 [shape = 's32[2]{0}', space=sflag, size = 0x8, scoped, tag = 'scoped memory for tpu_custom_call.1']
    %8 = vsyncpa [#allocation3], 0
    %s9 = scalar_lea.sflag [#allocation3], 1
    %10 = vsyncpa %s9, 0
    loop: start=0, step=1, limit=4
    $region2: #{tpu_custom_call.1} parent=1 // loop_pre_header
      _
    $region3: #{tpu_custom_call.1} parent=1 // loop_header
      %s12 = sphi 0, %s16
      %p13 = scmp.ge.s32.totalorder %s12, 4
      %s22 = sphi 0, %s24
      %s25 = sphi 0, %s22
      %s26 = sphi 0, %s25
      %s42 = sphi 0, %s26
      %s46 = sphi 0, %s46
      %s48 = sphi 0, %s46
      %s49 = sphi 0, %s48
      %s63 = sphi 0, %s49
      %s67 = sphi 0, %s67
      %s69 = sphi 0, %s67
      %s70 = sphi 0, %s69
      %s84 = sphi 0, %s70
      %s90 = sphi 0, %s92
      %s93 = sphi 0, %s90
      %s94 = sphi 0, %s93
      %s110 = sphi 0, %s94
    $region4: #{tpu_custom_call.1} parent=1 // loop_header_branch
      %15 = sbr.rel (%p13) target = $region8
    $region5: #{tpu_custom_call.1} parent=1 // loop_body
      %s17 = ssub.s32 %s12, 1
      %s18 = ssub.s32 %s12, 2
      %s19 = sadd.s32 %s12, 1
      %s20 = ssub.s32 %s12, %s19
      %p21 = scmp.eq.s32.totalorder %s20, 0
      %s23 = sadd.s32 %s22, 1
      %s24 = scalar_select %p21, %s22, %s23
      %p27 = pneg %p21
      %p28 = scmp.eq.s32.totalorder %s12, 1
      %p29 = por %p27, %p28
      %p30 = scmp.ne.s32.totalorder %s22, %s25
      %p31 = scmp.eq.s32.totalorder %s12, 0
      %p32 = por %p30, %p31
      %p33 = scmp.ne.s32.totalorder %s22, %s25
      %p34 = scmp.eq.s32.totalorder %s17, 1
      %p35 = por %p33, %p34
      %p36 = scmp.ne.s32.totalorder %s25, %s26
      %p37 = scmp.eq.s32.totalorder %s17, 0
      %p38 = por %p36, %p37
      %p39 = scmp.ne.s32.totalorder %s25, %s26
      %p40 = scmp.eq.s32.totalorder %s18, 1
      %p41 = por %p39, %p40
      %p43 = scmp.ne.s32.totalorder %s26, %s42
      %p44 = scmp.eq.s32.totalorder %s18, 0
      %p45 = por %p43, %p44
      %s47 = sadd.s32 %s46, 1
      %p50 = scmp.eq.s32.totalorder %s12, 1
      %p51 = scmp.ne.s32.totalorder %s46, %s48
      %p52 = scmp.eq.s32.totalorder %s12, 0
      %p53 = por %p51, %p52
      %p54 = scmp.ne.s32.totalorder %s46, %s48
      %p55 = scmp.eq.s32.totalorder %s17, 1
      %p56 = por %p54, %p55
      %p57 = scmp.ne.s32.totalorder %s48, %s49
      %p58 = scmp.eq.s32.totalorder %s17, 0
      %p59 = por %p57, %p58
      %p60 = scmp.ne.s32.totalorder %s48, %s49
      %p61 = scmp.eq.s32.totalorder %s18, 1
      %p62 = por %p60, %p61
      %p64 = scmp.ne.s32.totalorder %s49, %s63
      %p65 = scmp.eq.s32.totalorder %s18, 0
      %p66 = por %p64, %p65
      %s68 = sadd.s32 %s67, 1
      %p71 = scmp.eq.s32.totalorder %s12, 1
      %p72 = scmp.ne.s32.totalorder %s67, %s69
      %p73 = scmp.eq.s32.totalorder %s12, 0
      %p74 = por %p72, %p73
      %p75 = scmp.ne.s32.totalorder %s67, %s69
      %p76 = scmp.eq.s32.totalorder %s17, 1
      %p77 = por %p75, %p76
      %p78 = scmp.ne.s32.totalorder %s69, %s70
      %p79 = scmp.eq.s32.totalorder %s17, 0
      %p80 = por %p78, %p79
      %p81 = scmp.ne.s32.totalorder %s69, %s70
      %p82 = scmp.eq.s32.totalorder %s18, 1
      %p83 = por %p81, %p82
      %p85 = scmp.ne.s32.totalorder %s70, %s84
      %p86 = scmp.eq.s32.totalorder %s18, 0
      %p87 = por %p85, %p86
      %s88 = ssub.s32 %s12, %s19
      %p89 = scmp.eq.s32.totalorder %s88, 0
      %s91 = sadd.s32 %s90, 1
      %s92 = scalar_select %p89, %s90, %s91
      %p95 = pneg %p89
      %p96 = scmp.eq.s32.totalorder %s12, 1
      %p97 = por %p95, %p96
      %p98 = scmp.ne.s32.totalorder %s90, %s93
      %p99 = scmp.eq.s32.totalorder %s12, 0
      %p100 = por %p98, %p99
      %p101 = scmp.ne.s32.totalorder %s90, %s93
      %p102 = scmp.eq.s32.totalorder %s17, 1
      %p103 = por %p101, %p102
      %p104 = scmp.ne.s32.totalorder %s93, %s94
      %p105 = scmp.eq.s32.totalorder %s17, 0
      %p106 = por %p104, %p105
      %p107 = scmp.ne.s32.totalorder %s93, %s94
      %p108 = scmp.eq.s32.totalorder %s18, 1
      %p109 = por %p107, %p108
      %p111 = scmp.ne.s32.totalorder %s94, %s110
      %p112 = scmp.eq.s32.totalorder %s18, 0
      %p113 = por %p111, %p112
      %p114 = scmp.le.s32.totalorder 1, %s12
      %p115 = scmp.lt.s32.totalorder %s12, 3
      %p116 = pnand %p114, %p115
      %p117 = pneg %p116
      // Predicated region
      $region9: #{tpu_custom_call.1} parent=5 // pred_check
        _
      $region10: #{tpu_custom_call.1} parent=5 // pred_check_branch
        %119 = sbr.rel (%p116) target = $region12
      $region11: #{tpu_custom_call.1} parent=5 // pred_region
        %s120 = ssub.s32 %s12, 1
        // Predicated region
        $region13: #{tpu_custom_call.1} parent=11 // pred_check
          %p121 = pneg %p59
        $region14: #{tpu_custom_call.1} parent=11 // pred_check_branch
          %123 = sbr.rel (%p121) target = $region16
        $region15: #{tpu_custom_call.1} parent=11 // pred_region
          _
        $region16: #{tpu_custom_call.1} parent=11 // pred_fallthru
          _
        // Predicated region
        $region17: #{tpu_custom_call.1} parent=11 // pred_check
          %p124 = pneg %p80
        $region18: #{tpu_custom_call.1} parent=11 // pred_check_branch
          %126 = sbr.rel (%p124) target = $region20
        $region19: #{tpu_custom_call.1} parent=11 // pred_region
          _
        $region20: #{tpu_custom_call.1} parent=11 // pred_fallthru
          _
      $region12: #{tpu_custom_call.1} parent=5 // pred_fallthru
        _
      %p127 = scmp.lt.s32.totalorder %s12, 2
      // Predicated region
      $region21: #{tpu_custom_call.1} parent=5 // pred_check
        %p128 = pneg %p127
      $region22: #{tpu_custom_call.1} parent=5 // pred_check_branch
        %130 = sbr.rel (%p128) target = $region24
      $region23: #{tpu_custom_call.1} parent=5 // pred_region
        // Predicated region
        $region25: #{tpu_custom_call.1} parent=23 // pred_check
          %p131 = pneg %p32
        $region26: #{tpu_custom_call.1} parent=23 // pred_check_branch
          %133 = sbr.rel (%p131) target = $region28
        $region27: #{tpu_custom_call.1} parent=23 // pred_region
          %p134 = scmp.lt.s32.totalorder %s12, 1
          %s135 = scalar_select %p134, %s12, 1
          %s136 = smul.addr %s135, 8
          %s137 = scalar_lea.vmem %s0, %s136
        $region28: #{tpu_custom_call.1} parent=23 // pred_fallthru
          _
      $region24: #{tpu_custom_call.1} parent=5 // pred_fallthru
        _
      %p138 = scmp.le.s32.totalorder 1, %s12
      %p139 = scmp.lt.s32.totalorder %s12, 3
      %p140 = pnand %p138, %p139
      %p141 = pneg %p140
      // Predicated region
      $region29: #{tpu_custom_call.1} parent=5 // pred_check
        _
      $region30: #{tpu_custom_call.1} parent=5 // pred_check_branch
        %143 = sbr.rel (%p140) target = $region32
      $region31: #{tpu_custom_call.1} parent=5 // pred_region
        %s144 = ssub.s32 %s12, 1
        %p145 = scmp.lt.s32.totalorder %s17, 1
        %s146 = scalar_select %p145, %s17, 1
        %s147 = smul.addr %s146, 8
        %s148 = scalar_lea.vmem %s0, %s147
        %p149 = pneg %p38
        %p150 = pneg %p35
        %p151 = pneg %p59
        %p152 = pneg %p56
        %p153 = pneg %p80
        %p154 = pneg %p77
        %p155 = pneg %p106
        %p156 = pneg %p103
        %s157 = sand.u32 %s93, 1
        %s158 = scalar_lea.sflag [#allocation3], %s157
        %s159 = sand.u32 %s93, 1
        %s160 = smul.addr %s159, 8
        %s161 = scalar_lea.vmem [#allocation2], %s160
        %p162 = scmp.lt.s32.totalorder %s17, 1
        %s163 = scalar_select %p162, %s17, 1
        %s164 = smul.addr %s163, 8
        %s165 = scalar_lea.vmem %s0, %s164
        %s166 = smul.u32 %s17, 8
        %v167 = vld [vmem:[%s165] sm:$0xff]
        %v168 = vld [vmem:[%s1] sm:$0xff]
        %v169 = vld [vmem:[%s1 + $0x8] sm:$0xff]
        %s170 = scalar_lea.vmem %s1, %s166
        %v171 = vld [vmem:[%s170] sm:$0xff]
        %v172 = vld [vmem:[%s2] sm:$0xff]
        %v173 = vld [vmem:[%s2 + $0x8] sm:$0x1]
        %v174 = vld [vmem:[%s2 + $0x10] sm:$0xff]
        %v175 = vld [vmem:[%s2 + $0x18] sm:$0xff]
        %v176 = vld [vmem:[%s2 + $0x20] sm:$0xff]
        %v177 = vld [vmem:[%s2 + $0x28] sm:$0xff]
        %v178 = vld [vmem:[%s2 + $0x30] sm:$0xff]
        %v179 = vld [vmem:[%s2 + $0x38] sm:$0xff]
        %v180 = vld [vmem:[%s2 + $0x40] sm:$0xff]
        %v181 = vld [vmem:[%s2 + $0x48] sm:$0xff]
        %v182 = vld [vmem:[%s2 + $0x50] sm:$0x1]
        %v183 = vld [vmem:[%s2 + $0x58] sm:$0xff]
        %v184 = vld [vmem:[%s2 + $0x60] sm:$0xff]
        %v185 = vld [vmem:[%s2 + $0x68] sm:$0xff]
        %v186 = vld [vmem:[%s2 + $0x70] sm:$0xff]
        %v187 = vld [vmem:[%s2 + $0x78] sm:$0x1]
        %vm188 = vcmask 130048
        %v190 = vsel %vm188, %v167, 0
        %192 = vmatpush.msra.mxu0 0.0
        %193 = vmatpush.msra.mxu0 0.0
        %194 = vmatpush.msra.mxu0 0.0
        %195 = vmatpush.msra.mxu0 0.0
        %196 = vmatpush.msra.mxu0 0.0
        %197 = vmatpush.msra.mxu0 0.0
        %198 = vmatpush.msra.mxu0 0.0
        %199 = vmatpush.msra.mxu0 0.0
        %200 = vmatpush.msra.mxu0 0.0
        %201 = vmatpush.msra.mxu0 0.0
        %202 = vmatpush.msra.mxu0 0.0
        %203 = vmatpush.msra.mxu0 0.0
        %204 = vmatpush.msra.mxu0 0.0
        %205 = vmatpush.msra.mxu0 0.0
        %206 = vmatpush.msra.mxu0 %v169
        %207 = vmatpush.msra.mxu0 %v168
        %208 = vmatmul.f32.gmra.mxu0 %v190
        %v209 = vpop.f32.mrf.mxu0
        %v210 = vadd.f32 0.0, %v209
        %211 = vdwg.mxu0
        %v212 = vadd.f32 %v171, %v210
        %vm213 = vcmask 64512
        %v215 = vsel %vm213, %v212, 0
        %217 = vmatpush.msra.mxu0 0.0
        %218 = vmatpush.msra.mxu0 0.0
        %219 = vmatpush.msra.mxu0 0.0
        %220 = vmatpush.msra.mxu0 0.0
        %221 = vmatpush.msra.mxu0 0.0
        %222 = vmatpush.msra.mxu0 0.0
        %223 = vmatpush.msra.mxu0 0.0
        %224 = vmatpush.msra.mxu0 0.0
        %225 = vmatpush.msra.mxu0 0.0
        %226 = vmatpush.msra.mxu0 0.0
        %227 = vmatpush.msra.mxu0 0.0
        %228 = vmatpush.msra.mxu0 0.0
        %229 = vmatpush.msra.mxu0 0.0
        %230 = vmatpush.msra.mxu0 0.0
        %231 = vmatpush.msra.mxu0 0.0
        %232 = vmatpush.msra.mxu0 %v172
        %233 = vmatmul.f32.gmra.mxu0 %v215
        %v234 = vpop.f32.mrf.mxu0
        %v235 = vadd.f32 0.0, %v234
        %236 = vdwg.mxu0
        %v237 = vperm.slane %v173, 0
        %v238 = vadd.f32 %v235, %v237
        %v239 = vmax.f32 %v238, 0.0
        %v240 = vsub.f32 0.0, %v235
        %v241 = vadd.f32 %v240, %v237
        %v242 = vmax.f32 %v241, 0.0
        %v243 = vadd.f32 %v239, %v242
        %v244 = vperm.slane %v182, 0
        %vm245 = vcmask 523264
        %v247 = vsel %vm245, %v243, 0
        %249 = vmatpush.msra.mxu0 0.0
        %250 = vmatpush.msra.mxu0 0.0
        %251 = vmatpush.msra.mxu0 0.0
        %252 = vmatpush.msra.mxu0 0.0
        %253 = vmatpush.msra.mxu0 0.0
        %254 = vmatpush.msra.mxu0 0.0
        %255 = vmatpush.msra.mxu0 0.0
        %256 = vmatpush.msra.mxu0 0.0
        %257 = vmatpush.msra.mxu0 %v181
        %258 = vmatpush.msra.mxu0 %v180
        %259 = vmatpush.msra.mxu0 %v179
        %260 = vmatpush.msra.mxu0 %v178
        %261 = vmatpush.msra.mxu0 %v177
        %262 = vmatpush.msra.mxu0 %v176
        %263 = vmatpush.msra.mxu0 %v175
        %264 = vmatpush.msra.mxu0 %v174
        %265 = vmatmul.f32.gmra.mxu0 %v247
        %v266 = vpop.f32.mrf.mxu0
        %v267 = vadd.f32 %v244, %v266
        %268 = vdwg.mxu0
        %v269 = vmax.f32 %v267, 0.0
        %v270 = vperm.slane %v187, 0
        %vm271 = vcmask 261120
        %v273 = vsel %vm271, %v269, 0
        %275 = vmatpush.msra.mxu0 0.0
        %276 = vmatpush.msra.mxu0 0.0
        %277 = vmatpush.msra.mxu0 0.0
        %278 = vmatpush.msra.mxu0 0.0
        %279 = vmatpush.msra.mxu0 0.0
        %280 = vmatpush.msra.mxu0 0.0
        %281 = vmatpush.msra.mxu0 0.0
        %282 = vmatpush.msra.mxu0 0.0
        %283 = vmatpush.msra.mxu0 0.0
        %284 = vmatpush.msra.mxu0 0.0
        %285 = vmatpush.msra.mxu0 0.0
        %286 = vmatpush.msra.mxu0 0.0
        %287 = vmatpush.msra.mxu0 %v186
        %288 = vmatpush.msra.mxu0 %v185
        %289 = vmatpush.msra.mxu0 %v184
        %290 = vmatpush.msra.mxu0 %v183
        %291 = vmatmul.f32.gmra.mxu0 %v273
        %v292 = vpop.f32.mrf.mxu0
        %v293 = vadd.f32 %v270, %v292
        %294 = vdwg.mxu0
        %295 = vst.msk [vmem:[%s161] sm:$0xff] %vm188, %v293
        %s296 = sand.u32 %s93, 1
        %s297 = scalar_lea.sflag [#allocation3], %s296
        %s298 = sand.u32 %s93, 1
        %s299 = smul.addr %s298, 8
        %s300 = scalar_lea.vmem [#allocation2], %s299
        // Predicated region
        $region33: #{tpu_custom_call.1} parent=31 // pred_check
          %p301 = pneg %p103
        $region34: #{tpu_custom_call.1} parent=31 // pred_check_branch
          %303 = sbr.rel (%p301) target = $region36
        $region35: #{tpu_custom_call.1} parent=31 // pred_region
          %305 = vsyncadd %s297, 0
          %s306 = smul.addr %s17, 8
          %s307 = scalar_lea.hbm %s3, %s306
          %s309 = sshll.u32 %s300, 4
          %s310 = int_to_ptr.vmem [resolvable:$true] %s309
          %s311 = sshll.u32 %s307, 4
          %s312 = int_to_ptr.hbm [resolvable:$true] %s311
          %314 = dma.vmem_to_hbm [thread:$0]  %s310, 128, %s312, %s297
        $region36: #{tpu_custom_call.1} parent=31 // pred_fallthru
          _
      $region32: #{tpu_custom_call.1} parent=5 // pred_fallthru
        _
      %p315 = scmp.le.s32.totalorder 2, %s12
      // Predicated region
      $region37: #{tpu_custom_call.1} parent=5 // pred_check
        %p316 = pneg %p315
      $region38: #{tpu_custom_call.1} parent=5 // pred_check_branch
        %318 = sbr.rel (%p316) target = $region40
      $region39: #{tpu_custom_call.1} parent=5 // pred_region
        %s319 = ssub.s32 %s12, 2
        // Predicated region
        $region41: #{tpu_custom_call.1} parent=39 // pred_check
          %p320 = pneg %p109
        $region42: #{tpu_custom_call.1} parent=39 // pred_check_branch
          %322 = sbr.rel (%p320) target = $region44
        $region43: #{tpu_custom_call.1} parent=39 // pred_region
          %s323 = sand.u32 %s94, 1
          %s324 = scalar_lea.sflag [#allocation3], %s323
          %s325 = sand.u32 %s94, 1
          %s326 = smul.addr %s325, 8
          %s327 = scalar_lea.vmem [#allocation2], %s326
          %329 = dma.done %s324, 128
        $region44: #{tpu_custom_call.1} parent=39 // pred_fallthru
          _
      $region40: #{tpu_custom_call.1} parent=5 // pred_fallthru
        _
    $region6: #{tpu_custom_call.1} parent=1 // loop_footer
      %s16 = sadd.s32 1, %s12
    $region7: #{tpu_custom_call.1} parent=1 // loop_footer_branch
      %11 = sbr.rel target = $region3
    $region8: #{tpu_custom_call.1} parent=1 // loop_exit
      _
    %330 = vsyncpa [#allocation3], 1
    %s331 = scalar_lea.sflag [#allocation3], 1
    %332 = vsyncpa %s331, 1

</llo_original>
